<compile_context>
chip_gen: v7x
topology: tpu7x:2x2x1
jax: 0.10.0
libtpu: 0.0.40
codegen_flags: <defaults>
</compile_context>

<pallas_src>
import jax
import jax.numpy as jnp
from jax.experimental import pallas as pl
from jax.experimental.pallas import tpu as pltpu


def _embedding_kernel(ids_ref, table_ref, out_ref):
    """One grid step gathers `block_rows` embedding rows via a one-hot matmul.

    ids_ref:   (1, R) int32   — this block's indices (lane-major row).
    table_ref: (T, D) float32 — full table, VMEM-resident across the grid.
    out_ref:   (R, D) float32 — this block's gathered rows.
    """
    r = out_ref.shape[0]          # block_rows
    t = table_ref.shape[0]        # time_size

    ids = ids_ref[...]                                      # (1, R)

    # One-hot (T, R): onehot[t, r] = (t == ids[r]).  2-D iota along sublanes,
    # cheap sublane broadcast of the (1, R) id row.
    iota = jax.lax.broadcasted_iota(jnp.int32, (t, r), 0)   # (T, R)
    onehot = (iota == ids).astype(table_ref.dtype)          # (T, R)

    # out[r, d] = sum_t onehot[t, r] * table[t, d]  — single MXU pass.
    out_ref[...] = jax.lax.dot_general(
        onehot,
        table_ref[...],
        dimension_numbers=(((0,), (0,)), ((), ())),          # -> (R, D)
        preferred_element_type=jnp.float32,
    ).astype(out_ref.dtype)


def time_embeddings(time, table):
    """Pallas equivalent of nn.Embedding(time_size, D)(time).

    Args:
      time:  integer array, arbitrary shape (e.g. (B, S)), values in
             [0, time_size).
      table: (time_size, D) embedding weight.

    Returns:
      Array of shape time.shape + (D,), dtype of `table`.
    """
    time_size, d = table.shape
    ids = time.reshape(-1).astype(jnp.int32)
    n = ids.shape[0]

    # Lane-aligned row block: 128 for small problems, 512 once n is large
    # enough to benefit from bigger writeback slabs.
    block_rows = 512 if n >= 512 else 128
    n_blocks = pl.cdiv(n, block_rows)
    n_pad = n_blocks * block_rows

    # Pad ids to a whole number of blocks (padded entries read row 0 of the
    # table; those output rows are discarded below).
    ids_padded = jnp.pad(ids, (0, n_pad - n))
    ids2d = ids_padded.reshape(n_blocks, block_rows)

    out_flat = pl.pallas_call(
        _embedding_kernel,
        out_shape=jax.ShapeDtypeStruct((n_pad, d), table.dtype),
        grid=(n_blocks,),
        in_specs=[
            # Per-step (1, R) id slice — pipelined alongside the output.
            pl.BlockSpec((1, block_rows), lambda i: (i, 0)),
            # Table fully VMEM-resident (block == full array, constant map).
            pl.BlockSpec((time_size, d), lambda i: (0, 0)),
        ],
        # Lane/sublane-dense disjoint output tiles per grid step.
        out_specs=pl.BlockSpec((block_rows, d), lambda i: (i, 0)),
        compiler_params=pltpu.CompilerParams(
            dimension_semantics=("parallel",),
        ),
    )(ids2d, table)

    return out_flat[:n].reshape(time.shape + (d,))


if __name__ == "__main__":
    # Small shapes consistent with the module: time_size=16 timesteps,
    # time_embed_dim=128 (lane-aligned), batch=2, seq=8.
    time_size = 16
    time_embed_dim = 128
    batch, seq = 2, 8

    key = jax.random.PRNGKey(0)
    k_table, k_idx = jax.random.split(key)

    # nn.Embedding default init: weights ~ N(0, 1).
    table = jax.random.normal(k_table, (time_size, time_embed_dim),
                              dtype=jnp.float32)
    time = jax.random.randint(k_idx, (batch, seq), 0, time_size,
                              dtype=jnp.int32)

    out = time_embeddings(time, table)
    out = jax.block_until_ready(out)

    # Correctness check against plain-JAX gather (== torch nn.Embedding).
    ref = jnp.take(table, time, axis=0)
    assert out.shape == (batch, seq, time_embed_dim), out.shape
    assert jnp.allclose(out, ref), "mismatch vs reference gather"

    print("KERNEL_OK")
</pallas_src>

<mosaic_0001>
module attributes {stable_mosaic.version = 11 : i64} {
  func.func @_embedding_kernel(%arg0: i32, %arg1: memref<1x128xi32, #tpu.memory_space<vmem>>, %arg2: memref<16x128xf32, #tpu.memory_space<vmem>>, %arg3: memref<128x128xf32, #tpu.memory_space<vmem>>) attributes {dimension_semantics = [#tpu.dimension_semantics<parallel>], iteration_bounds = array<i64: 1>, scalar_prefetch = 0 : i64, scratch_operands = 0 : i64, tpu.core_type = #tpu.core_type<tc>, window_params = [{transform_indices = @transform_0, window_bounds = array<i64: 1, 128>}, {pipeline_mode = #tpu.pipeline_mode<synchronous>, transform_indices = @transform_1, window_bounds = array<i64: 16, 128>}, {transform_indices = @transform_2, window_bounds = array<i64: 128, 128>}]} {
    %c0 = arith.constant 0 : index
    %c0_0 = arith.constant 0 : index
    %0 = vector.load %arg1[%c0, %c0_0] : memref<1x128xi32, #tpu.memory_space<vmem>>, vector<1x128xi32>
    %1 = tpu.iota {dimensions = array<i32: 0>} : vector<16x128xi32>
    %2 = vector.broadcast %0 : vector<1x128xi32> to vector<16x128xi32>
    %3 = arith.cmpi eq, %1, %2 : vector<16x128xi32>
    %4 = arith.extui %3 : vector<16x128xi1> to vector<16x128xi32>
    %5 = arith.sitofp %4 : vector<16x128xi32> to vector<16x128xf32>
    %c0_1 = arith.constant 0 : index
    %c0_2 = arith.constant 0 : index
    %6 = vector.load %arg2[%c0_1, %c0_2] : memref<16x128xf32, #tpu.memory_space<vmem>>, vector<16x128xf32>
    %cst = arith.constant dense<0.000000e+00> : vector<128x128xf32>
    %7 = tpu.matmul %5, %6, %cst {dimension_numbers = #tpu.dot_dimension_numbers<[0], [0], [1], [1], [0, 1, 1, 1], [], []>} : vector<16x128xf32>, vector<16x128xf32>, vector<128x128xf32> -> vector<128x128xf32>
    %c0_3 = arith.constant 0 : index
    %c0_4 = arith.constant 0 : index
    %8 = vector.load %arg3[%c0_3, %c0_4] : memref<128x128xf32, #tpu.memory_space<vmem>>, vector<128x128xf32>
    tpu.vector_store %arg3[%c0_3, %c0_4], %7 {strides = array<i32>} : memref<128x128xf32, #tpu.memory_space<vmem>>, vector<128x128xf32>,
    return
  }
  func.func @transform_0(%arg0: i32) -> (i32, i32) {
    %c0_i32 = arith.constant 0 : i32
    %c0_i32_0 = arith.constant 0 : i32
    return %arg0, %c0_i32 : i32, i32
  }
  func.func @transform_1(%arg0: i32) -> (i32, i32) {
    %c0_i32 = arith.constant 0 : i32
    %c0_i32_0 = arith.constant 0 : i32
    %c0_i32_1 = arith.constant 0 : i32
    return %c0_i32, %c0_i32_0 : i32, i32
  }
  func.func @transform_2(%arg0: i32) -> (i32, i32) {
    %c0_i32 = arith.constant 0 : i32
    %c0_i32_0 = arith.constant 0 : i32
    return %arg0, %c0_i32 : i32, i32
  }
}

</mosaic_0001>

<llo_original>
// kernel: tpu_custom_call.1
$region0: #{tpu_custom_call.1}
  #allocation0 [shape = 'u32[]', space=smem, size = 0x4, offset = 0x4, fixed_abs, tag = 'smem constant byte address 0x4 - core index']
  #allocation1 [shape = 'u32[144,128]{1,0:T(1,128)}', space=vmem, size = 0x12000, scoped, tag = 'internal scratch']
  %s0 = inlined_call_operand.hbm [shape: s32[1,128], index: 0, kind: input, shape index: {}]
  %s1 = inlined_call_operand.hbm [shape: f32[16,128], index: 1, kind: input, shape index: {}]
  %s2 = inlined_call_operand.hbm [shape: f32[128,128], index: 2, kind: output, shape index: {}]
  %s3 = sld [smem:[#allocation0]]
  $region26: #{tpu_custom_call.1} parent=0
    _
  %s5 = ssub.s32 1, %s3
  %s6 = scalar_select 0, %s5, %s3
  $region1: #{tpu_custom_call.1} parent=0
    #allocation2 [shape = 'u8[512]{0}', space=vmem, size = 0x400, scoped, tag = 'input window, operand 0, single buffered']
    #allocation3 [shape = 's32[1]{0}', space=sflag, size = 0x4, scoped, tag = 'scoped memory for tpu_custom_call.1']
    #allocation4 [shape = 's32[1]{0}', space=sflag, size = 0x4, scoped, tag = 'scoped memory for tpu_custom_call.1']
    #allocation5 [shape = 'u8[8192]{0}', space=vmem, size = 0x2000, scoped, tag = 'input window, operand 1, single buffered']
    #allocation6 [shape = 's32[1]{0}', space=sflag, size = 0x4, scoped, tag = 'scoped memory for tpu_custom_call.1']
    #allocation7 [shape = 'u8[65536]{0}', space=vmem, size = 0x10000, scoped, tag = 'output window, operand 0, single buffered']
    %7 = vsyncpa [#allocation3], 0
    %8 = vsyncpa [#allocation6], 0
    %9 = vsyncpa [#allocation4], 0
    // Predicated region
    $region2: #{tpu_custom_call.1} parent=1 // pred_check
      _
    $region3: #{tpu_custom_call.1} parent=1 // pred_check_branch
      %11 = sbr.rel (0) target = $region5
    $region4: #{tpu_custom_call.1} parent=1 // pred_region
      %s13 = ssub.s32 16, 16
      %14 = vsyncadd [#allocation3], %s13
      %s16 = sshll.u32 [#allocation2], 4
      %s17 = int_to_ptr.vmem [resolvable:$true] %s16
      %19 = dma.hbm_to_vmem [thread:$0]  %s0, 16, %s17, [#allocation3]
    $region5: #{tpu_custom_call.1} parent=1 // pred_fallthru
      _
    // Predicated region
    $region6: #{tpu_custom_call.1} parent=1 // pred_check
      _
    $region7: #{tpu_custom_call.1} parent=1 // pred_check_branch
      %21 = sbr.rel (0) target = $region9
    $region8: #{tpu_custom_call.1} parent=1 // pred_region
      %s23 = ssub.s32 256, 256
      %24 = vsyncadd [#allocation6], %s23
      %s25 = sshll.u32 [#allocation5], 4
      %s26 = int_to_ptr.vmem [resolvable:$true] %s25
      %31 = dma.hbm_to_vmem [thread:$0]  %s1, 256, %s26, [#allocation6], 128, 128, 8
    $region9: #{tpu_custom_call.1} parent=1 // pred_fallthru
      _
    // Predicated region
    $region10: #{tpu_custom_call.1} parent=1 // pred_check
      _
    $region11: #{tpu_custom_call.1} parent=1 // pred_check_branch
      %33 = sbr.rel (0) target = $region13
    $region12: #{tpu_custom_call.1} parent=1 // pred_region
      %34 = dma.done [#allocation3], 16
    $region13: #{tpu_custom_call.1} parent=1 // pred_fallthru
      _
    // Predicated region
    $region14: #{tpu_custom_call.1} parent=1 // pred_check
      _
    $region15: #{tpu_custom_call.1} parent=1 // pred_check_branch
      %36 = sbr.rel (0) target = $region17
    $region16: #{tpu_custom_call.1} parent=1 // pred_region
      %37 = dma.done [#allocation6], 256
    $region17: #{tpu_custom_call.1} parent=1 // pred_fallthru
      _
    %v38 = vld [vmem:[#allocation2] sm:$0x1]
    %v39 = vlaneseq
    %v40 = vshrl.u32 %v39, 7
    %v41 = vadd.s32 %v40, 8
    %v42 = vlaneseq
    %v43 = vshrl.u32 %v42, 7
    %v44 = vsub.s32 0, %v43
    %v45 = vrot.slane %v38, %v44
    %vm46 = vcmp.eq.s32.totalorder %v40, %v45
    %vm47 = vcmp.eq.s32.totalorder %v41, %v45
    %v48 = vsel %vm46, 1, 0
    %v49 = vsel %vm47, 1, 0
    %v50 = vcvt.s32.f32 %v48
    %v51 = vcvt.s32.f32 %v49
    %v52 = vld [vmem:[#allocation5] sm:$0xff]
    %v53 = vld [vmem:[#allocation5 + $0x8] sm:$0xff]
    %54 = vxpose.xlu0.b32.start [1/16] %v50, 128
    %55 = vxpose.xlu0.b32.cont [2/16] %v51, 128
    %56 = vxpose.xlu0.b32.cont [3/16] 0.0, 128
    %57 = vxpose.xlu0.b32.cont [4/16] 0.0, 128
    %58 = vxpose.xlu0.b32.cont [5/16] 0.0, 128
    %59 = vxpose.xlu0.b32.cont [6/16] 0.0, 128
    %60 = vxpose.xlu0.b32.cont [7/16] 0.0, 128
    %61 = vxpose.xlu0.b32.cont [8/16] 0.0, 128
    %62 = vxpose.xlu0.b32.cont [9/16] 0.0, 128
    %63 = vxpose.xlu0.b32.cont [10/16] 0.0, 128
    %64 = vxpose.xlu0.b32.cont [11/16] 0.0, 128
    %65 = vxpose.xlu0.b32.cont [12/16] 0.0, 128
    %66 = vxpose.xlu0.b32.cont [13/16] 0.0, 128
    %67 = vxpose.xlu0.b32.cont [14/16] 0.0, 128
    %68 = vxpose.xlu0.b32.cont [15/16] 0.0, 128
    %69 = vxpose.xlu0.b32.end [16/16] 0.0, 128
    %v70 = vpop.trf.xlu0
    %v71 = vpop.trf.xlu0
    %v72 = vpop.trf.xlu0
    %v73 = vpop.trf.xlu0
    %v74 = vpop.trf.xlu0
    %v75 = vpop.trf.xlu0
    %v76 = vpop.trf.xlu0
    %v77 = vpop.trf.xlu0
    %v78 = vpop.trf.xlu0
    %v79 = vpop.trf.xlu0
    %v80 = vpop.trf.xlu0
    %v81 = vpop.trf.xlu0
    %v82 = vpop.trf.xlu0
    %v83 = vpop.trf.xlu0
    %v84 = vpop.trf.xlu0
    %v85 = vpop.trf.xlu0
    %vm86 = vcmask 130048
    %v88 = vsel %vm86, %v70, 0
    %v91 = vsel %vm86, %v71, 0
    %v94 = vsel %vm86, %v72, 0
    %v97 = vsel %vm86, %v73, 0
    %v100 = vsel %vm86, %v74, 0
    %v103 = vsel %vm86, %v75, 0
    %v106 = vsel %vm86, %v76, 0
    %v109 = vsel %vm86, %v77, 0
    %v112 = vsel %vm86, %v78, 0
    %v115 = vsel %vm86, %v79, 0
    %v118 = vsel %vm86, %v80, 0
    %v121 = vsel %vm86, %v81, 0
    %v124 = vsel %vm86, %v82, 0
    %v127 = vsel %vm86, %v83, 0
    %v130 = vsel %vm86, %v84, 0
    %v133 = vsel %vm86, %v85, 0
    %135 = vmatprep.subr.mxu0 0.0
    %136 = vmatpush1.msra.mxu0 %v52
    %137 = vmatprep.subr.mxu0 0.0
    %138 = vmatpush1.msra.mxu0 %v53
    %139 = vmatprep.subr.mxu0 0.0
    %140 = vmatpush1.msra.mxu0 0.0
    %141 = vmatprep.subr.mxu0 0.0
    %142 = vmatpush1.msra.mxu0 0.0
    %143 = vmatprep.subr.mxu0 0.0
    %144 = vmatpush1.msra.mxu0 0.0
    %145 = vmatprep.subr.mxu0 0.0
    %146 = vmatpush1.msra.mxu0 0.0
    %147 = vmatprep.subr.mxu0 0.0
    %148 = vmatpush1.msra.mxu0 0.0
    %149 = vmatprep.subr.mxu0 0.0
    %150 = vmatpush1.msra.mxu0 0.0
    %151 = vmatprep.subr.mxu0 0.0
    %152 = vmatpush1.msra.mxu0 0.0
    %153 = vmatprep.subr.mxu0 0.0
    %154 = vmatpush1.msra.mxu0 0.0
    %155 = vmatprep.subr.mxu0 0.0
    %156 = vmatpush1.msra.mxu0 0.0
    %157 = vmatprep.subr.mxu0 0.0
    %158 = vmatpush1.msra.mxu0 0.0
    %159 = vmatprep.subr.mxu0 0.0
    %160 = vmatpush1.msra.mxu0 0.0
    %161 = vmatprep.subr.mxu0 0.0
    %162 = vmatpush1.msra.mxu0 0.0
    %163 = vmatprep.subr.mxu0 0.0
    %164 = vmatpush1.msra.mxu0 0.0
    %165 = vmatprep.subr.mxu0 0.0
    %166 = vmatpush1.msra.mxu0 0.0
    %167 = vmatprep.subr.mxu0 0.0
    %168 = vmatpush1.msra.mxu0 0.0
    %169 = vmatprep.subr.mxu0 0.0
    %170 = vmatpush1.msra.mxu0 0.0
    %171 = vmatprep.subr.mxu0 0.0
    %172 = vmatpush1.msra.mxu0 0.0
    %173 = vmatprep.subr.mxu0 0.0
    %174 = vmatpush1.msra.mxu0 0.0
    %175 = vmatprep.subr.mxu0 0.0
    %176 = vmatpush1.msra.mxu0 0.0
    %177 = vmatprep.subr.mxu0 0.0
    %178 = vmatpush1.msra.mxu0 0.0
    %179 = vmatprep.subr.mxu0 0.0
    %180 = vmatpush1.msra.mxu0 0.0
    %181 = vmatprep.subr.mxu0 0.0
    %182 = vmatpush1.msra.mxu0 0.0
    %183 = vmatprep.subr.mxu0 0.0
    %184 = vmatpush1.msra.mxu0 0.0
    %185 = vmatprep.subr.mxu0 0.0
    %186 = vmatpush1.msra.mxu0 0.0
    %187 = vmatprep.subr.mxu0 0.0
    %188 = vmatpush1.msra.mxu0 0.0
    %189 = vmatprep.subr.mxu0 0.0
    %190 = vmatpush1.msra.mxu0 0.0
    %191 = vmatprep.subr.mxu0 0.0
    %192 = vmatpush1.msra.mxu0 0.0
    %193 = vmatprep.subr.mxu0 0.0
    %194 = vmatpush1.msra.mxu0 0.0
    %195 = vmatprep.subr.mxu0 0.0
    %196 = vmatpush1.msra.mxu0 0.0
    %197 = vmatprep.subr.mxu0 0.0
    %198 = vmatpush1.msra.mxu0 0.0
    %199 = vmatprep.mubr.f32.mxu0 0.0
    %200 = vmatmul.mubr.f32.gmra.mrb[0].mxu0 %v88
    %v201 = vpop.f32.mrb[0].mxu0
    %v202 = vadd.f32 0.0, %v201
    %v203 = vpop.f32.mrb[0].mxu0
    %204 = vmatprep.mubr.f32.mxu0 0.0
    %205 = vmatmul.mubr.f32.gmra.mrb[0].mxu0 %v91
    %v206 = vpop.f32.mrb[0].mxu0
    %v207 = vadd.f32 0.0, %v206
    %v208 = vpop.f32.mrb[0].mxu0
    %209 = vmatprep.mubr.f32.mxu0 0.0
    %210 = vmatmul.mubr.f32.gmra.mrb[0].mxu0 %v94
    %v211 = vpop.f32.mrb[0].mxu0
    %v212 = vadd.f32 0.0, %v211
    %v213 = vpop.f32.mrb[0].mxu0
    %214 = vmatprep.mubr.f32.mxu0 0.0
    %215 = vmatmul.mubr.f32.gmra.mrb[0].mxu0 %v97
    %v216 = vpop.f32.mrb[0].mxu0
    %v217 = vadd.f32 0.0, %v216
    %v218 = vpop.f32.mrb[0].mxu0
    %219 = vmatprep.mubr.f32.mxu0 0.0
    %220 = vmatmul.mubr.f32.gmra.mrb[0].mxu0 %v100
    %v221 = vpop.f32.mrb[0].mxu0
    %v222 = vadd.f32 0.0, %v221
    %v223 = vpop.f32.mrb[0].mxu0
    %224 = vmatprep.mubr.f32.mxu0 0.0
    %225 = vmatmul.mubr.f32.gmra.mrb[0].mxu0 %v103
    %v226 = vpop.f32.mrb[0].mxu0
    %v227 = vadd.f32 0.0, %v226
    %v228 = vpop.f32.mrb[0].mxu0
    %229 = vmatprep.mubr.f32.mxu0 0.0
    %230 = vmatmul.mubr.f32.gmra.mrb[0].mxu0 %v106
    %v231 = vpop.f32.mrb[0].mxu0
    %v232 = vadd.f32 0.0, %v231
    %v233 = vpop.f32.mrb[0].mxu0
    %234 = vmatprep.mubr.f32.mxu0 0.0
    %235 = vmatmul.mubr.f32.gmra.mrb[0].mxu0 %v109
    %v236 = vpop.f32.mrb[0].mxu0
    %v237 = vadd.f32 0.0, %v236
    %v238 = vpop.f32.mrb[0].mxu0
    %239 = vmatprep.mubr.f32.mxu0 0.0
    %240 = vmatmul.mubr.f32.gmra.mrb[0].mxu0 %v112
    %v241 = vpop.f32.mrb[0].mxu0
    %v242 = vadd.f32 0.0, %v241
    %v243 = vpop.f32.mrb[0].mxu0
    %244 = vmatprep.mubr.f32.mxu0 0.0
    %245 = vmatmul.mubr.f32.gmra.mrb[0].mxu0 %v115
    %v246 = vpop.f32.mrb[0].mxu0
    %v247 = vadd.f32 0.0, %v246
    %v248 = vpop.f32.mrb[0].mxu0
    %249 = vmatprep.mubr.f32.mxu0 0.0
    %250 = vmatmul.mubr.f32.gmra.mrb[0].mxu0 %v118
    %v251 = vpop.f32.mrb[0].mxu0
    %v252 = vadd.f32 0.0, %v251
    %v253 = vpop.f32.mrb[0].mxu0
    %254 = vmatprep.mubr.f32.mxu0 0.0
    %255 = vmatmul.mubr.f32.gmra.mrb[0].mxu0 %v121
    %v256 = vpop.f32.mrb[0].mxu0
    %v257 = vadd.f32 0.0, %v256
    %v258 = vpop.f32.mrb[0].mxu0
    %259 = vmatprep.mubr.f32.mxu0 0.0
    %260 = vmatmul.mubr.f32.gmra.mrb[0].mxu0 %v124
    %v261 = vpop.f32.mrb[0].mxu0
    %v262 = vadd.f32 0.0, %v261
    %v263 = vpop.f32.mrb[0].mxu0
    %264 = vmatprep.mubr.f32.mxu0 0.0
    %265 = vmatmul.mubr.f32.gmra.mrb[0].mxu0 %v127
    %v266 = vpop.f32.mrb[0].mxu0
    %v267 = vadd.f32 0.0, %v266
    %v268 = vpop.f32.mrb[0].mxu0
    %269 = vmatprep.mubr.f32.mxu0 0.0
    %270 = vmatmul.mubr.f32.gmra.mrb[0].mxu0 %v130
    %v271 = vpop.f32.mrb[0].mxu0
    %v272 = vadd.f32 0.0, %v271
    %v273 = vpop.f32.mrb[0].mxu0
    %274 = vmatprep.mubr.f32.mxu0 0.0
    %275 = vmatmul.mubr.f32.gmra.mrb[0].mxu0 %v133
    %v276 = vpop.f32.mrb[0].mxu0
    %v277 = vadd.f32 0.0, %v276
    %v278 = vpop.f32.mrb[0].mxu0
    %279 = vdwg.mxu0
    %280 = vst [vmem:[#allocation7] sm:$0xff] %v202
    %281 = vst [vmem:[#allocation7 + $0x8] sm:$0xff] %v207
    %282 = vst [vmem:[#allocation7 + $0x10] sm:$0xff] %v212
    %283 = vst [vmem:[#allocation7 + $0x18] sm:$0xff] %v217
    %284 = vst [vmem:[#allocation7 + $0x20] sm:$0xff] %v222
    %285 = vst [vmem:[#allocation7 + $0x28] sm:$0xff] %v227
    %286 = vst [vmem:[#allocation7 + $0x30] sm:$0xff] %v232
    %287 = vst [vmem:[#allocation7 + $0x38] sm:$0xff] %v237
    %288 = vst [vmem:[#allocation7 + $0x40] sm:$0xff] %v242
    %289 = vst [vmem:[#allocation7 + $0x48] sm:$0xff] %v247
    %290 = vst [vmem:[#allocation7 + $0x50] sm:$0xff] %v252
    %291 = vst [vmem:[#allocation7 + $0x58] sm:$0xff] %v257
    %292 = vst [vmem:[#allocation7 + $0x60] sm:$0xff] %v262
    %293 = vst [vmem:[#allocation7 + $0x68] sm:$0xff] %v267
    %294 = vst [vmem:[#allocation7 + $0x70] sm:$0xff] %v272
    %295 = vst [vmem:[#allocation7 + $0x78] sm:$0xff] %v277
    // Predicated region
    $region18: #{tpu_custom_call.1} parent=1 // pred_check
      _
    $region19: #{tpu_custom_call.1} parent=1 // pred_check_branch
      %297 = sbr.rel (0) target = $region21
    $region20: #{tpu_custom_call.1} parent=1 // pred_region
      %s299 = ssub.s32 2048, 2048
      %300 = vsyncadd [#allocation4], %s299
      %s301 = sshll.u32 [#allocation7], 4
      %s302 = int_to_ptr.vmem [resolvable:$true] %s301
      %307 = dma.vmem_to_hbm [thread:$0]  %s302, 2048, %s2, [#allocation4], 128, 128, 8
    $region21: #{tpu_custom_call.1} parent=1 // pred_fallthru
      _
    // Predicated region
    $region22: #{tpu_custom_call.1} parent=1 // pred_check
      _
    $region23: #{tpu_custom_call.1} parent=1 // pred_check_branch
      %309 = sbr.rel (0) target = $region25
    $region24: #{tpu_custom_call.1} parent=1 // pred_region
      %310 = dma.done [#allocation4], 2048
    $region25: #{tpu_custom_call.1} parent=1 // pred_fallthru
      _
    %311 = vsyncpa [#allocation3], 1
    %312 = vsyncpa [#allocation6], 1
    %313 = vsyncpa [#allocation4], 1

</llo_original>
